<compile_context>
chip_gen: v6e
topology: v6e:2x2x1
jax: 0.10.0
libtpu: 0.0.40
codegen_flags: <defaults>
</compile_context>

<pallas_src>
import functools

import jax
import jax.numpy as jnp
from jax import lax
from jax.experimental import pallas as pl
from jax.experimental.pallas import tpu as pltpu


def critic_kernel(state_ref, action_ref, w1s_ref, w1a_ref, b1_ref,
                  w2_ref, b2_ref, w3r_ref, b3_ref, out_ref):
    # Compute dtype for the MXU dots = dtype the weights are stored in
    # (f32 or bf16); accumulation is always f32, biases/ReLU always f32.
    dt = w1s_ref.dtype

    # Layer 1: split matmul replaces concat([state, action]) @ W1.
    h1 = jnp.dot(state_ref[...].astype(dt), w1s_ref[...],
                 preferred_element_type=jnp.float32)
    h1 = h1 + jnp.dot(action_ref[...].astype(dt), w1a_ref[...],
                      preferred_element_type=jnp.float32)
    h1 = jnp.maximum(h1 + b1_ref[...], 0.0)

    # Layer 2.
    h2 = jnp.dot(h1.astype(dt), w2_ref[...], preferred_element_type=jnp.float32)
    h2 = jnp.maximum(h2 + b2_ref[...], 0.0)

    # Layer 3, directly in lane-dense orientation:
    #   (1, H) . (bm, H)^T -> (1, bm)   (dot_general "NT" pattern, MXU).
    q = lax.dot_general(
        w3r_ref[...], h2.astype(dt),
        dimension_numbers=(((1,), (1,)), ((), ())),
        preferred_element_type=jnp.float32)

    # b3 is a scalar fetched from SMEM; one full-width (1, bm) store per step.
    out_ref[...] = (q + b3_ref[0, 0]).astype(out_ref.dtype)

    # TODO(synk): if the surrounding SAC code uses twin Q-networks, fuse Q1/Q2
    # into one pallas_call (stack W1/W2 on a leading axis, W3 rows side by
    # side) to reuse the state/action DMA and halve launch overhead.


@functools.partial(jax.jit, static_argnames=("block_batch",))
def critic_forward(state, action, params, *, block_batch=1024):
    """state: (B, num_inputs), action: (B, num_actions) -> (B, 1) float32."""
    w1_s, w1_a, b1, w2, b2, w3_row, b3 = params
    B, num_inputs = state.shape
    num_actions = action.shape[1]

    # Batch tile. Single block: just 8-align the sublane dim. Multi-block:
    # 128-align so every output (1, bm) chunk is a full, tile-aligned lane run
    # (unmasked stores, tile-disjoint writes across "parallel" grid steps).
    bm = max(1, min(block_batch, B))
    if bm < B:
        bm = ((bm + 127) // 128) * 128
    else:
        bm = ((bm + 7) // 8) * 8
    num_blocks = pl.cdiv(B, bm)
    B_pad = num_blocks * bm

    def act_spec(cols):                      # tiled along batch; ragged tail OK
        return pl.BlockSpec((bm, cols), lambda i: (i, 0))

    def resident_spec(shape):                # constant index -> stays in VMEM
        return pl.BlockSpec(shape, lambda i: (0, 0))

    out = pl.pallas_call(
        critic_kernel,
        out_shape=jax.ShapeDtypeStruct((1, B_pad), jnp.float32),
        grid=(num_blocks,),
        in_specs=[
            act_spec(num_inputs),                                # state
            act_spec(num_actions),                               # action
            resident_spec(w1_s.shape),                           # W1[:num_inputs]
            resident_spec(w1_a.shape),                           # W1[num_inputs:]
            resident_spec(b1.shape),                             # b1 (1, H) f32
            resident_spec(w2.shape),                             # W2 (H, H)
            resident_spec(b2.shape),                             # b2 (1, H) f32
            resident_spec(w3_row.shape),                         # W3^T (1, H)
            pl.BlockSpec(memory_space=pltpu.MemorySpace.SMEM),   # b3 scalar
        ],
        # Lane-dense output: one (1, bm) row per grid step.
        out_specs=pl.BlockSpec((1, bm), lambda i: (0, i)),
        compiler_params=pltpu.CompilerParams(
            dimension_semantics=("parallel",),                   # megacore on v7x
        ),
    )(state, action, w1_s, w1_a, b1, w2, b2, w3_row, b3)

    # Only the tiny (B_pad,) output row is reshaped/sliced; state/action are
    # never padded or copied.
    return out.reshape(B_pad, 1)[:B]


def init_critic_params(key, num_inputs, num_actions, hidden_dim,
                       dtype=jnp.float32):
    """Xavier-uniform weights (gain=1), zero biases — mirrors weights_init_.

    Weights are stored pre-split (W1 -> W1_state / W1_action) and W3 in its
    (1, H) row layout, and cast once to `dtype` (f32 or bf16).  Biases stay f32.
    """
    def xavier(key, fan_in, fan_out):
        limit = jnp.sqrt(6.0 / (fan_in + fan_out))
        return jax.random.uniform(
            key, (fan_in, fan_out), jnp.float32, minval=-limit, maxval=limit)

    k1, k2, k3 = jax.random.split(key, 3)
    d_in = num_inputs + num_actions
    w1 = xavier(k1, d_in, hidden_dim)
    w1_s = w1[:num_inputs, :].astype(dtype)       # split once, at init
    w1_a = w1[num_inputs:, :].astype(dtype)
    b1 = jnp.zeros((1, hidden_dim), jnp.float32)
    w2 = xavier(k2, hidden_dim, hidden_dim).astype(dtype)
    b2 = jnp.zeros((1, hidden_dim), jnp.float32)
    w3_row = xavier(k3, hidden_dim, 1).reshape(1, hidden_dim).astype(dtype)
    b3 = jnp.zeros((1, 1), jnp.float32)
    return (w1_s, w1_a, b1, w2, b2, w3_row, b3)


def reference_forward(state, action, params):
    """Pure-JAX reference with the same dtype policy as the kernel
    (dots in the weight dtype, f32 accumulation, f32 biases/ReLU)."""
    w1_s, w1_a, b1, w2, b2, w3_row, b3 = params
    dt = w1_s.dtype
    h1 = (jnp.dot(state.astype(dt), w1_s, preferred_element_type=jnp.float32)
          + jnp.dot(action.astype(dt), w1_a, preferred_element_type=jnp.float32)
          + b1)
    h1 = jnp.maximum(h1, 0.0)
    h2 = jnp.dot(h1.astype(dt), w2, preferred_element_type=jnp.float32) + b2
    h2 = jnp.maximum(h2, 0.0)
    return jnp.dot(h2.astype(dt), w3_row.T,
                   preferred_element_type=jnp.float32) + b3


if __name__ == "__main__":
    # Small shapes consistent with the module's forward.
    batch, num_inputs, num_actions, hidden_dim = 8, 24, 8, 32

    key = jax.random.PRNGKey(0)
    k_state, k_action, k_params = jax.random.split(key, 3)

    state = jax.random.normal(k_state, (batch, num_inputs), jnp.float32)
    action = jax.random.normal(k_action, (batch, num_actions), jnp.float32)
    params = init_critic_params(k_params, num_inputs, num_actions, hidden_dim)

    out = critic_forward(state, action, params)
    jax.block_until_ready(out)
    ref = reference_forward(state, action, params)
    assert out.shape == (batch, 1)
    assert jnp.allclose(out, ref, atol=1e-4, rtol=1e-4)

    # Ragged multi-block grid: exercises the pad-free tail-block path, the
    # lane-dense (1, bm) output tiling, and resident-weight index maps.
    batch2 = 260
    k_s2, k_a2 = jax.random.split(jax.random.PRNGKey(1))
    state2 = jax.random.normal(k_s2, (batch2, num_inputs), jnp.float32)
    action2 = jax.random.normal(k_a2, (batch2, num_actions), jnp.float32)
    out2 = critic_forward(state2, action2, params, block_batch=128)
    jax.block_until_ready(out2)
    ref2 = reference_forward(state2, action2, params)
    assert out2.shape == (batch2, 1)
    assert jnp.allclose(out2, ref2, atol=1e-4, rtol=1e-4)

    # bf16 weight/activation path (native bf16 MXU, f32 accumulation). The
    # reference applies the same rounding policy, so only accumulation-order
    # noise remains -> loose-but-meaningful tolerance.
    params_bf16 = init_critic_params(
        k_params, num_inputs, num_actions, hidden_dim, dtype=jnp.bfloat16)
    out3 = critic_forward(state2, action2, params_bf16, block_batch=128)
    jax.block_until_ready(out3)
    ref3 = reference_forward(state2, action2, params_bf16)
    assert out3.shape == (batch2, 1)
    assert jnp.allclose(out3, ref3, atol=1e-2, rtol=1e-2)

    print("KERNEL_OK")
</pallas_src>

<mosaic_0001>
module attributes {stable_mosaic.version = 11 : i64} {
  func.func @critic_kernel(%arg0: i32, %arg1: memref<8x24xf32, #tpu.memory_space<vmem>>, %arg2: memref<8x8xf32, #tpu.memory_space<vmem>>, %arg3: memref<24x32xf32, #tpu.memory_space<vmem>>, %arg4: memref<8x32xf32, #tpu.memory_space<vmem>>, %arg5: memref<1x32xf32, #tpu.memory_space<vmem>>, %arg6: memref<32x32xf32, #tpu.memory_space<vmem>>, %arg7: memref<1x32xf32, #tpu.memory_space<vmem>>, %arg8: memref<1x32xf32, #tpu.memory_space<vmem>>, %arg9: memref<1x1xf32, #tpu.memory_space<smem>>, %arg10: memref<1x8xf32, #tpu.memory_space<vmem>>) attributes {dimension_semantics = [#tpu.dimension_semantics<parallel>], iteration_bounds = array<i64: 1>, scalar_prefetch = 0 : i64, scratch_operands = 0 : i64, tpu.core_type = #tpu.core_type<tc>, window_params = [{transform_indices = @transform_0, window_bounds = array<i64: 8, 24>}, {transform_indices = @transform_1, window_bounds = array<i64: 8, 8>}, {pipeline_mode = #tpu.pipeline_mode<synchronous>, transform_indices = @transform_2, window_bounds = array<i64: 24, 32>}, {pipeline_mode = #tpu.pipeline_mode<synchronous>, transform_indices = @transform_3, window_bounds = array<i64: 8, 32>}, {pipeline_mode = #tpu.pipeline_mode<synchronous>, transform_indices = @transform_4, window_bounds = array<i64: 1, 32>}, {pipeline_mode = #tpu.pipeline_mode<synchronous>, transform_indices = @transform_5, window_bounds = array<i64: 32, 32>}, {pipeline_mode = #tpu.pipeline_mode<synchronous>, transform_indices = @transform_6, window_bounds = array<i64: 1, 32>}, {pipeline_mode = #tpu.pipeline_mode<synchronous>, transform_indices = @transform_7, window_bounds = array<i64: 1, 32>}, {transform_indices = @transform_8, window_bounds = array<i64: 1, 1>}, {transform_indices = @transform_9, window_bounds = array<i64: 1, 8>}]} {
    %c0 = arith.constant 0 : index
    %c0_0 = arith.constant 0 : index
    %0 = vector.load %arg1[%c0, %c0_0] : memref<8x24xf32, #tpu.memory_space<vmem>>, vector<8x24xf32>
    %c0_1 = arith.constant 0 : index
    %c0_2 = arith.constant 0 : index
    %1 = vector.load %arg3[%c0_1, %c0_2] : memref<24x32xf32, #tpu.memory_space<vmem>>, vector<24x32xf32>
    %cst = arith.constant dense<0.000000e+00> : vector<8x32xf32>
    %2 = tpu.matmul %0, %1, %cst {dimension_numbers = #tpu.dot_dimension_numbers<[1], [0], [0], [1], [0, 0, 1, 1], [], []>} : vector<8x24xf32>, vector<24x32xf32>, vector<8x32xf32> -> vector<8x32xf32>
    %c0_3 = arith.constant 0 : index
    %c0_4 = arith.constant 0 : index
    %3 = vector.load %arg2[%c0_3, %c0_4] : memref<8x8xf32, #tpu.memory_space<vmem>>, vector<8x8xf32>
    %c0_5 = arith.constant 0 : index
    %c0_6 = arith.constant 0 : index
    %4 = vector.load %arg4[%c0_5, %c0_6] : memref<8x32xf32, #tpu.memory_space<vmem>>, vector<8x32xf32>
    %cst_7 = arith.constant dense<0.000000e+00> : vector<8x32xf32>
    %5 = tpu.matmul %3, %4, %cst_7 {dimension_numbers = #tpu.dot_dimension_numbers<[1], [0], [0], [1], [0, 0, 1, 1], [], []>} : vector<8x8xf32>, vector<8x32xf32>, vector<8x32xf32> -> vector<8x32xf32>
    %6 = arith.addf %2, %5 : vector<8x32xf32>
    %c0_8 = arith.constant 0 : index
    %c0_9 = arith.constant 0 : index
    %7 = vector.load %arg5[%c0_8, %c0_9] : memref<1x32xf32, #tpu.memory_space<vmem>>, vector<1x32xf32>
    %8 = vector.broadcast %7 : vector<1x32xf32> to vector<8x32xf32>
    %9 = arith.addf %6, %8 : vector<8x32xf32>
    %cst_10 = arith.constant 0.000000e+00 : f32
    %10 = vector.broadcast %cst_10 : f32 to vector<8x32xf32>
    %11 = arith.maximumf %9, %10 : vector<8x32xf32>
    %c0_11 = arith.constant 0 : index
    %c0_12 = arith.constant 0 : index
    %12 = vector.load %arg6[%c0_11, %c0_12] : memref<32x32xf32, #tpu.memory_space<vmem>>, vector<32x32xf32>
    %cst_13 = arith.constant dense<0.000000e+00> : vector<8x32xf32>
    %13 = tpu.matmul %11, %12, %cst_13 {dimension_numbers = #tpu.dot_dimension_numbers<[1], [0], [0], [1], [0, 0, 1, 1], [], []>} : vector<8x32xf32>, vector<32x32xf32>, vector<8x32xf32> -> vector<8x32xf32>
    %c0_14 = arith.constant 0 : index
    %c0_15 = arith.constant 0 : index
    %14 = vector.load %arg7[%c0_14, %c0_15] : memref<1x32xf32, #tpu.memory_space<vmem>>, vector<1x32xf32>
    %15 = vector.broadcast %14 : vector<1x32xf32> to vector<8x32xf32>
    %16 = arith.addf %13, %15 : vector<8x32xf32>
    %cst_16 = arith.constant 0.000000e+00 : f32
    %17 = vector.broadcast %cst_16 : f32 to vector<8x32xf32>
    %18 = arith.maximumf %16, %17 : vector<8x32xf32>
    %c0_17 = arith.constant 0 : index
    %c0_18 = arith.constant 0 : index
    %19 = vector.load %arg8[%c0_17, %c0_18] : memref<1x32xf32, #tpu.memory_space<vmem>>, vector<1x32xf32>
    %cst_19 = arith.constant dense<0.000000e+00> : vector<1x8xf32>
    %20 = tpu.matmul %19, %18, %cst_19 {dimension_numbers = #tpu.dot_dimension_numbers<[1], [1], [0], [0], [0, 0, 1, 0], [], []>} : vector<1x32xf32>, vector<8x32xf32>, vector<1x8xf32> -> vector<1x8xf32>
    %c0_20 = arith.constant 0 : index
    %c0_21 = arith.constant 0 : index
    %21 = memref.load %arg9[%c0_20, %c0_21] : memref<1x1xf32, #tpu.memory_space<smem>>
    %22 = vector.broadcast %21 : f32 to vector<1x8xf32>
    %23 = arith.addf %20, %22 : vector<1x8xf32>
    %c0_22 = arith.constant 0 : index
    %c0_23 = arith.constant 0 : index
    %24 = vector.load %arg10[%c0_22, %c0_23] : memref<1x8xf32, #tpu.memory_space<vmem>>, vector<1x8xf32>
    tpu.vector_store %arg10[%c0_22, %c0_23], %23 {strides = array<i32>} : memref<1x8xf32, #tpu.memory_space<vmem>>, vector<1x8xf32>,
    return
  }
  func.func @transform_0(%arg0: i32) -> (i32, i32) {
    %c0_i32 = arith.constant 0 : i32
    %c0_i32_0 = arith.constant 0 : i32
    return %arg0, %c0_i32 : i32, i32
  }
  func.func @transform_1(%arg0: i32) -> (i32, i32) {
    %c0_i32 = arith.constant 0 : i32
    %c0_i32_0 = arith.constant 0 : i32
    return %arg0, %c0_i32 : i32, i32
  }
  func.func @transform_2(%arg0: i32) -> (i32, i32) {
    %c0_i32 = arith.constant 0 : i32
    %c0_i32_0 = arith.constant 0 : i32
    %c0_i32_1 = arith.constant 0 : i32
    return %c0_i32, %c0_i32_0 : i32, i32
  }
  func.func @transform_3(%arg0: i32) -> (i32, i32) {
    %c0_i32 = arith.constant 0 : i32
    %c0_i32_0 = arith.constant 0 : i32
    %c0_i32_1 = arith.constant 0 : i32
    return %c0_i32, %c0_i32_0 : i32, i32
  }
  func.func @transform_4(%arg0: i32) -> (i32, i32) {
    %c0_i32 = arith.constant 0 : i32
    %c0_i32_0 = arith.constant 0 : i32
    %c0_i32_1 = arith.constant 0 : i32
    return %c0_i32, %c0_i32_0 : i32, i32
  }
  func.func @transform_5(%arg0: i32) -> (i32, i32) {
    %c0_i32 = arith.constant 0 : i32
    %c0_i32_0 = arith.constant 0 : i32
    %c0_i32_1 = arith.constant 0 : i32
    return %c0_i32, %c0_i32_0 : i32, i32
  }
  func.func @transform_6(%arg0: i32) -> (i32, i32) {
    %c0_i32 = arith.constant 0 : i32
    %c0_i32_0 = arith.constant 0 : i32
    %c0_i32_1 = arith.constant 0 : i32
    return %c0_i32, %c0_i32_0 : i32, i32
  }
  func.func @transform_7(%arg0: i32) -> (i32, i32) {
    %c0_i32 = arith.constant 0 : i32
    %c0_i32_0 = arith.constant 0 : i32
    %c0_i32_1 = arith.constant 0 : i32
    return %c0_i32, %c0_i32_0 : i32, i32
  }
  func.func @transform_8(%arg0: i32) -> (i32, i32) {
    %c0_i32 = arith.constant 0 : i32
    %c0_i32_0 = arith.constant 0 : i32
    %c0_i32_1 = arith.constant 0 : i32
    return %c0_i32, %c0_i32_0 : i32, i32
  }
  func.func @transform_9(%arg0: i32) -> (i32, i32) {
    %c0_i32 = arith.constant 0 : i32
    %c0_i32_0 = arith.constant 0 : i32
    return %c0_i32, %arg0 : i32, i32
  }
}

</mosaic_0001>

<llo_original>
// kernel: critic_forward.1
$region0: #{critic_forward.1}
  #allocation0 [shape = 'u32[]', space=smem, size = 0x4, offset = 0x4, fixed_abs, tag = 'smem constant byte address 0x4 - core index']
  #allocation1 [shape = 'u32[144,128]{1,0:T(1,128)}', space=vmem, size = 0x12000, scoped, tag = 'internal scratch']
  #allocation2 [shape = 'f32[1,1]{1,0:T(1,128)S(6)}', space=smem, size = 0x200, scoped, tag = 'scoped memory for critic_forward.1']
  %s0 = inlined_call_operand.hbm [shape: f32[8,24], index: 0, kind: input, shape index: {}]
  %s1 = inlined_call_operand.hbm [shape: f32[8,8], index: 1, kind: input, shape index: {}]
  %s2 = inlined_call_operand.hbm [shape: f32[24,32], index: 2, kind: input, shape index: {}]
  %s3 = inlined_call_operand.hbm [shape: f32[8,32], index: 3, kind: input, shape index: {}]
  %s4 = inlined_call_operand.vmem [shape: f32[1,32], index: 4, kind: input, shape index: {}]
  %s5 = inlined_call_operand.hbm [shape: f32[32,32], index: 5, kind: input, shape index: {}]
  %s6 = inlined_call_operand.vmem [shape: f32[1,32], index: 6, kind: input, shape index: {}]
  %s7 = inlined_call_operand.vmem [shape: f32[1,32], index: 7, kind: input, shape index: {}]
  %s8 = inlined_call_operand.<no memory space> [shape: f32[1,1], index: 8, kind: input, shape index: {}]
  %s9 = inlined_call_operand.hbm [shape: f32[1,8], index: 9, kind: output, shape index: {}]
  %s10 = sld [smem:[#allocation0]]
  $region66: #{critic_forward.1} parent=0
    _
  %s12 = ssub.s32 1, %s10
  %s13 = scalar_select 0, %s12, %s10
  %14 = sst [smem:[#allocation2]] %s8
  $region1: #{critic_forward.1} parent=0
    #allocation3 [shape = 'u8[4096]{0}', space=vmem, size = 0x1000, scoped, tag = 'input window, operand 0, single buffered']
    #allocation4 [shape = 's32[1]{0}', space=sflag, size = 0x4, scoped, tag = 'scoped memory for critic_forward.1']
    #allocation5 [shape = 's32[1]{0}', space=sflag, size = 0x4, scoped, tag = 'scoped memory for critic_forward.1']
    #allocation6 [shape = 'u8[4096]{0}', space=vmem, size = 0x1000, scoped, tag = 'input window, operand 1, single buffered']
    #allocation7 [shape = 's32[1]{0}', space=sflag, size = 0x4, scoped, tag = 'scoped memory for critic_forward.1']
    #allocation8 [shape = 'u8[12288]{0}', space=vmem, size = 0x3000, scoped, tag = 'input window, operand 2, single buffered']
    #allocation9 [shape = 'u8[4096]{0}', space=vmem, size = 0x1000, scoped, tag = 'input window, operand 3, single buffered']
    #allocation10 [shape = 's32[1]{0}', space=sflag, size = 0x4, scoped, tag = 'scoped memory for critic_forward.1']
    #allocation11 [shape = 'u8[16384]{0}', space=vmem, size = 0x4000, scoped, tag = 'input window, operand 5, single buffered']
    #allocation12 [shape = 'u8[512]{0}', space=vmem, size = 0x400, scoped, tag = 'output window, operand 0, single buffered']
    %15 = vsyncpa [#allocation4], 0
    %16 = vsyncpa [#allocation7], 0
    %17 = vsyncpa [#allocation10], 0
    %18 = vsyncpa [#allocation5], 0
    // Predicated region
    $region2: #{critic_forward.1} parent=1 // pred_check
      _
    $region3: #{critic_forward.1} parent=1 // pred_check_branch
      %20 = sbr.rel (0) target = $region5
    $region4: #{critic_forward.1} parent=1 // pred_region
      %s22 = ssub.s32 128, 128
      %23 = vsyncadd [#allocation4], %s22
      %s25 = sshll.u32 [#allocation3], 4
      %s26 = int_to_ptr.vmem [resolvable:$true] %s25
      %28 = dma.hbm_to_vmem [thread:$0]  %s0, 128, %s26, [#allocation4]
    $region5: #{critic_forward.1} parent=1 // pred_fallthru
      _
    // Predicated region
    $region6: #{critic_forward.1} parent=1 // pred_check
      _
    $region7: #{critic_forward.1} parent=1 // pred_check_branch
      %30 = sbr.rel (0) target = $region9
    $region8: #{critic_forward.1} parent=1 // pred_region
      %s32 = ssub.s32 128, 128
      %33 = vsyncadd [#allocation7], %s32
      %s35 = sshll.u32 [#allocation6], 4
      %s36 = int_to_ptr.vmem [resolvable:$true] %s35
      %38 = dma.hbm_to_vmem [thread:$0]  %s1, 128, %s36, [#allocation7]
    $region9: #{critic_forward.1} parent=1 // pred_fallthru
      _
    // Predicated region
    $region10: #{critic_forward.1} parent=1 // pred_check
      _
    $region11: #{critic_forward.1} parent=1 // pred_check_branch
      %40 = sbr.rel (0) target = $region13
    $region12: #{critic_forward.1} parent=1 // pred_region
      %s42 = ssub.s32 384, 384
      %43 = vsyncadd [#allocation7], %s42
      %s44 = sshll.u32 [#allocation8], 4
      %s45 = int_to_ptr.vmem [resolvable:$true] %s44
      %50 = dma.hbm_to_vmem [thread:$0]  %s2, 384, %s45, [#allocation7], 128, 128, 8
    $region13: #{critic_forward.1} parent=1 // pred_fallthru
      _
    // Predicated region
    $region14: #{critic_forward.1} parent=1 // pred_check
      _
    $region15: #{critic_forward.1} parent=1 // pred_check_branch
      %52 = sbr.rel (0) target = $region17
    $region16: #{critic_forward.1} parent=1 // pred_region
      %s54 = ssub.s32 128, 128
      %55 = vsyncadd [#allocation10], %s54
      %s57 = sshll.u32 [#allocation9], 4
      %s58 = int_to_ptr.vmem [resolvable:$true] %s57
      %60 = dma.hbm_to_vmem [thread:$0]  %s3, 128, %s58, [#allocation10]
    $region17: #{critic_forward.1} parent=1 // pred_fallthru
      _
    // Predicated region
    $region18: #{critic_forward.1} parent=1 // pred_check
      _
    $region19: #{critic_forward.1} parent=1 // pred_check_branch
      %62 = sbr.rel (0) target = $region21
    $region20: #{critic_forward.1} parent=1 // pred_region
      _
    $region21: #{critic_forward.1} parent=1 // pred_fallthru
      _
    // Predicated region
    $region22: #{critic_forward.1} parent=1 // pred_check
      _
    $region23: #{critic_forward.1} parent=1 // pred_check_branch
      %64 = sbr.rel (0) target = $region25
    $region24: #{critic_forward.1} parent=1 // pred_region
      %s66 = ssub.s32 512, 512
      %67 = vsyncadd [#allocation10], %s66
      %s68 = sshll.u32 [#allocation11], 4
      %s69 = int_to_ptr.vmem [resolvable:$true] %s68
      %74 = dma.hbm_to_vmem [thread:$0]  %s5, 512, %s69, [#allocation10], 128, 128, 8
    $region25: #{critic_forward.1} parent=1 // pred_fallthru
      _
    // Predicated region
    $region26: #{critic_forward.1} parent=1 // pred_check
      _
    $region27: #{critic_forward.1} parent=1 // pred_check_branch
      %76 = sbr.rel (0) target = $region29
    $region28: #{critic_forward.1} parent=1 // pred_region
      _
    $region29: #{critic_forward.1} parent=1 // pred_fallthru
      _
    // Predicated region
    $region30: #{critic_forward.1} parent=1 // pred_check
      _
    $region31: #{critic_forward.1} parent=1 // pred_check_branch
      %78 = sbr.rel (0) target = $region33
    $region32: #{critic_forward.1} parent=1 // pred_region
      _
    $region33: #{critic_forward.1} parent=1 // pred_fallthru
      _
    // Predicated region
    $region34: #{critic_forward.1} parent=1 // pred_check
      _
    $region35: #{critic_forward.1} parent=1 // pred_check_branch
      %80 = sbr.rel (0) target = $region37
    $region36: #{critic_forward.1} parent=1 // pred_region
      _
    $region37: #{critic_forward.1} parent=1 // pred_fallthru
      _
    // Predicated region
    $region38: #{critic_forward.1} parent=1 // pred_check
      _
    $region39: #{critic_forward.1} parent=1 // pred_check_branch
      %82 = sbr.rel (0) target = $region41
    $region40: #{critic_forward.1} parent=1 // pred_region
      %83 = dma.done [#allocation4], 128
    $region41: #{critic_forward.1} parent=1 // pred_fallthru
      _
    // Predicated region
    $region42: #{critic_forward.1} parent=1 // pred_check
      _
    $region43: #{critic_forward.1} parent=1 // pred_check_branch
      %85 = sbr.rel (0) target = $region45
    $region44: #{critic_forward.1} parent=1 // pred_region
      %86 = dma.done [#allocation7], 128
    $region45: #{critic_forward.1} parent=1 // pred_fallthru
      _
    // Predicated region
    $region46: #{critic_forward.1} parent=1 // pred_check
      _
    $region47: #{critic_forward.1} parent=1 // pred_check_branch
      %88 = sbr.rel (0) target = $region49
    $region48: #{critic_forward.1} parent=1 // pred_region
      %89 = dma.done [#allocation7], 384
    $region49: #{critic_forward.1} parent=1 // pred_fallthru
      _
    // Predicated region
    $region50: #{critic_forward.1} parent=1 // pred_check
      _
    $region51: #{critic_forward.1} parent=1 // pred_check_branch
      %91 = sbr.rel (0) target = $region53
    $region52: #{critic_forward.1} parent=1 // pred_region
      %92 = dma.done [#allocation10], 128
    $region53: #{critic_forward.1} parent=1 // pred_fallthru
      _
    // Predicated region
    $region54: #{critic_forward.1} parent=1 // pred_check
      _
    $region55: #{critic_forward.1} parent=1 // pred_check_branch
      %94 = sbr.rel (0) target = $region57
    $region56: #{critic_forward.1} parent=1 // pred_region
      %95 = dma.done [#allocation10], 512
    $region57: #{critic_forward.1} parent=1 // pred_fallthru
      _
    %v96 = vld [vmem:[#allocation3] sm:$0xff]
    %v97 = vld [vmem:[#allocation8] sm:$0xff]
    %v98 = vld [vmem:[#allocation8 + $0x8] sm:$0xff]
    %v99 = vld [vmem:[#allocation8 + $0x10] sm:$0xff]
    %v100 = vld [vmem:[#allocation6] sm:$0xff]
    %v101 = vld [vmem:[#allocation9] sm:$0xff]
    %vm102 = vcmask 64512
    %v104 = vsel %vm102, %v100, 0
    %106 = vmatprep.subr.mxu0 0.0
    %107 = vmatpush1.msra.mxu0 0.0
    %108 = vmatprep.subr.mxu0 0.0
    %109 = vmatpush1.msra.mxu0 0.0
    %110 = vmatprep.subr.mxu0 0.0
    %111 = vmatpush1.msra.mxu0 0.0
    %112 = vmatprep.subr.mxu0 0.0
    %113 = vmatpush1.msra.mxu0 0.0
    %114 = vmatprep.subr.mxu0 0.0
    %115 = vmatpush1.msra.mxu0 0.0
    %116 = vmatprep.subr.mxu0 0.0
    %117 = vmatpush1.msra.mxu0 0.0
    %118 = vmatprep.subr.mxu0 0.0
    %119 = vmatpush1.msra.mxu0 0.0
    %120 = vmatprep.subr.mxu0 0.0
    %121 = vmatpush1.msra.mxu0 0.0
    %122 = vmatprep.subr.mxu0 0.0
    %123 = vmatpush1.msra.mxu0 0.0
    %124 = vmatprep.subr.mxu0 0.0
    %125 = vmatpush1.msra.mxu0 0.0
    %126 = vmatprep.subr.mxu0 0.0
    %127 = vmatpush1.msra.mxu0 0.0
    %128 = vmatprep.subr.mxu0 0.0
    %129 = vmatpush1.msra.mxu0 0.0
    %130 = vmatprep.subr.mxu0 0.0
    %131 = vmatpush1.msra.mxu0 0.0
    %132 = vmatprep.subr.mxu0 0.0
    %133 = vmatpush1.msra.mxu0 0.0
    %134 = vmatprep.subr.mxu0 0.0
    %135 = vmatpush1.msra.mxu0 0.0
    %136 = vmatprep.subr.mxu0 0.0
    %137 = vmatpush1.msra.mxu0 %v101
    %138 = vmatprep.subr.mxu0 0.0
    %139 = vmatpush2.msra.mxu0 0.0
    %140 = vmatprep.subr.mxu0 0.0
    %141 = vmatpush2.msra.mxu0 0.0
    %142 = vmatprep.subr.mxu0 0.0
    %143 = vmatpush2.msra.mxu0 0.0
    %144 = vmatprep.subr.mxu0 0.0
    %145 = vmatpush2.msra.mxu0 0.0
    %146 = vmatprep.subr.mxu0 0.0
    %147 = vmatpush2.msra.mxu0 0.0
    %148 = vmatprep.subr.mxu0 0.0
    %149 = vmatpush2.msra.mxu0 0.0
    %150 = vmatprep.subr.mxu0 0.0
    %151 = vmatpush2.msra.mxu0 0.0
    %152 = vmatprep.subr.mxu0 0.0
    %153 = vmatpush2.msra.mxu0 0.0
    %154 = vmatprep.subr.mxu0 0.0
    %155 = vmatpush2.msra.mxu0 0.0
    %156 = vmatprep.subr.mxu0 0.0
    %157 = vmatpush2.msra.mxu0 0.0
    %158 = vmatprep.subr.mxu0 0.0
    %159 = vmatpush2.msra.mxu0 0.0
    %160 = vmatprep.subr.mxu0 0.0
    %161 = vmatpush2.msra.mxu0 0.0
    %162 = vmatprep.subr.mxu0 0.0
    %163 = vmatpush2.msra.mxu0 0.0
    %164 = vmatprep.subr.mxu0 0.0
    %165 = vmatpush2.msra.mxu0 0.0
    %166 = vmatprep.subr.mxu0 0.0
    %167 = vmatpush2.msra.mxu0 0.0
    %168 = vmatprep.subr.mxu0 0.0
    %169 = vmatpush2.msra.mxu0 0.0
    %170 = vmatprep.mubr.f32.mxu0 0.0
    %171 = vmatmul.mubr.f32.gmra.mxu0 %v104
    %v172 = vpop.f32.mrf.mxu0
    %v173 = vadd.f32 0.0, %v172
    %v174 = vpop.f32.mrf.mxu0
    %175 = vdwg.mxu0
    %vm176 = vcmask 195584
    %v178 = vsel %vm176, %v96, 0
    %180 = vmatprep.subr.mxu0 0.0
    %181 = vmatpush1.msra.mxu0 0.0
    %182 = vmatprep.subr.mxu0 0.0
    %183 = vmatpush1.msra.mxu0 0.0
    %184 = vmatprep.subr.mxu0 0.0
    %185 = vmatpush1.msra.mxu0 0.0
    %186 = vmatprep.subr.mxu0 0.0
    %187 = vmatpush1.msra.mxu0 0.0
    %188 = vmatprep.subr.mxu0 0.0
    %189 = vmatpush1.msra.mxu0 0.0
    %190 = vmatprep.subr.mxu0 0.0
    %191 = vmatpush1.msra.mxu0 0.0
    %192 = vmatprep.subr.mxu0 0.0
    %193 = vmatpush1.msra.mxu0 0.0
    %194 = vmatprep.subr.mxu0 0.0
    %195 = vmatpush1.msra.mxu0 0.0
    %196 = vmatprep.subr.mxu0 0.0
    %197 = vmatpush1.msra.mxu0 0.0
    %198 = vmatprep.subr.mxu0 0.0
    %199 = vmatpush1.msra.mxu0 0.0
    %200 = vmatprep.subr.mxu0 0.0
    %201 = vmatpush1.msra.mxu0 0.0
    %202 = vmatprep.subr.mxu0 0.0
    %203 = vmatpush1.msra.mxu0 0.0
    %204 = vmatprep.subr.mxu0 0.0
    %205 = vmatpush1.msra.mxu0 0.0
    %206 = vmatprep.subr.mxu0 0.0
    %207 = vmatpush1.msra.mxu0 %v99
    %208 = vmatprep.subr.mxu0 0.0
    %209 = vmatpush1.msra.mxu0 %v98
    %210 = vmatprep.subr.mxu0 0.0
    %211 = vmatpush1.msra.mxu0 %v97
    %212 = vmatprep.subr.mxu0 0.0
    %213 = vmatpush2.msra.mxu0 0.0
    %214 = vmatprep.subr.mxu0 0.0
    %215 = vmatpush2.msra.mxu0 0.0
    %216 = vmatprep.subr.mxu0 0.0
    %217 = vmatpush2.msra.mxu0 0.0
    %218 = vmatprep.subr.mxu0 0.0
    %219 = vmatpush2.msra.mxu0 0.0
    %220 = vmatprep.subr.mxu0 0.0
    %221 = vmatpush2.msra.mxu0 0.0
    %222 = vmatprep.subr.mxu0 0.0
    %223 = vmatpush2.msra.mxu0 0.0
    %224 = vmatprep.subr.mxu0 0.0
    %225 = vmatpush2.msra.mxu0 0.0
    %226 = vmatprep.subr.mxu0 0.0
    %227 = vmatpush2.msra.mxu0 0.0
    %228 = vmatprep.subr.mxu0 0.0
    %229 = vmatpush2.msra.mxu0 0.0
    %230 = vmatprep.subr.mxu0 0.0
    %231 = vmatpush2.msra.mxu0 0.0
    %232 = vmatprep.subr.mxu0 0.0
    %233 = vmatpush2.msra.mxu0 0.0
    %234 = vmatprep.subr.mxu0 0.0
    %235 = vmatpush2.msra.mxu0 0.0
    %236 = vmatprep.subr.mxu0 0.0
    %237 = vmatpush2.msra.mxu0 0.0
    %238 = vmatprep.subr.mxu0 0.0
    %239 = vmatpush2.msra.mxu0 0.0
    %240 = vmatprep.subr.mxu0 0.0
    %241 = vmatpush2.msra.mxu0 0.0
    %242 = vmatprep.subr.mxu0 0.0
    %243 = vmatpush2.msra.mxu0 0.0
    %244 = vmatprep.mubr.f32.mxu0 0.0
    %245 = vmatmul.mubr.f32.gmra.mxu0 %v178
    %v246 = vpop.f32.mrf.mxu0
    %v247 = vadd.f32 %v173, %v246
    %v248 = vpop.f32.mrf.mxu0
    %249 = vdwg.mxu0
    %v250 = vld [vmem:[%s4] sm:$0x1]
    %v252 = vlaneseq
    %v253 = vshrl.u32 %v252, 7
    %v254 = vsub.s32 0, %v253
    %v255 = vrot.slane %v250, %v254
    %v257 = vadd.f32 %v247, %v255
    %v258 = vmax.f32 %v257, 0.0
    %v259 = vld [vmem:[#allocation11] sm:$0xff]
    %v260 = vld [vmem:[#allocation11 + $0x8] sm:$0xff]
    %v261 = vld [vmem:[#allocation11 + $0x10] sm:$0xff]
    %v262 = vld [vmem:[#allocation11 + $0x18] sm:$0xff]
    %v263 = vld [vmem:[%s6] sm:$0x1]
    %v265 = vlaneseq
    %v266 = vshrl.u32 %v265, 7
    %v267 = vsub.s32 0, %v266
    %v268 = vrot.slane %v263, %v267
    %vm270 = vcmask 261120
    %v272 = vsel %vm270, %v258, 0
    %274 = vmatprep.subr.mxu0 0.0
    %275 = vmatpush1.msra.mxu0 0.0
    %276 = vmatprep.subr.mxu0 0.0
    %277 = vmatpush1.msra.mxu0 0.0
    %278 = vmatprep.subr.mxu0 0.0
    %279 = vmatpush1.msra.mxu0 0.0
    %280 = vmatprep.subr.mxu0 0.0
    %281 = vmatpush1.msra.mxu0 0.0
    %282 = vmatprep.subr.mxu0 0.0
    %283 = vmatpush1.msra.mxu0 0.0
    %284 = vmatprep.subr.mxu0 0.0
    %285 = vmatpush1.msra.mxu0 0.0
    %286 = vmatprep.subr.mxu0 0.0
    %287 = vmatpush1.msra.mxu0 0.0
    %288 = vmatprep.subr.mxu0 0.0
    %289 = vmatpush1.msra.mxu0 0.0
    %290 = vmatprep.subr.mxu0 0.0
    %291 = vmatpush1.msra.mxu0 0.0
    %292 = vmatprep.subr.mxu0 0.0
    %293 = vmatpush1.msra.mxu0 0.0
    %294 = vmatprep.subr.mxu0 0.0
    %295 = vmatpush1.msra.mxu0 0.0
    %296 = vmatprep.subr.mxu0 0.0
    %297 = vmatpush1.msra.mxu0 0.0
    %298 = vmatprep.subr.mxu0 0.0
    %299 = vmatpush1.msra.mxu0 %v262
    %300 = vmatprep.subr.mxu0 0.0
    %301 = vmatpush1.msra.mxu0 %v261
    %302 = vmatprep.subr.mxu0 0.0
    %303 = vmatpush1.msra.mxu0 %v260
    %304 = vmatprep.subr.mxu0 0.0
    %305 = vmatpush1.msra.mxu0 %v259
    %306 = vmatprep.subr.mxu0 0.0
    %307 = vmatpush2.msra.mxu0 0.0
    %308 = vmatprep.subr.mxu0 0.0
    %309 = vmatpush2.msra.mxu0 0.0
    %310 = vmatprep.subr.mxu0 0.0
    %311 = vmatpush2.msra.mxu0 0.0
    %312 = vmatprep.subr.mxu0 0.0
    %313 = vmatpush2.msra.mxu0 0.0
    %314 = vmatprep.subr.mxu0 0.0
    %315 = vmatpush2.msra.mxu0 0.0
    %316 = vmatprep.subr.mxu0 0.0
    %317 = vmatpush2.msra.mxu0 0.0
    %318 = vmatprep.subr.mxu0 0.0
    %319 = vmatpush2.msra.mxu0 0.0
    %320 = vmatprep.subr.mxu0 0.0
    %321 = vmatpush2.msra.mxu0 0.0
    %322 = vmatprep.subr.mxu0 0.0
    %323 = vmatpush2.msra.mxu0 0.0
    %324 = vmatprep.subr.mxu0 0.0
    %325 = vmatpush2.msra.mxu0 0.0
    %326 = vmatprep.subr.mxu0 0.0
    %327 = vmatpush2.msra.mxu0 0.0
    %328 = vmatprep.subr.mxu0 0.0
    %329 = vmatpush2.msra.mxu0 0.0
    %330 = vmatprep.subr.mxu0 0.0
    %331 = vmatpush2.msra.mxu0 0.0
    %332 = vmatprep.subr.mxu0 0.0
    %333 = vmatpush2.msra.mxu0 0.0
    %334 = vmatprep.subr.mxu0 0.0
    %335 = vmatpush2.msra.mxu0 0.0
    %336 = vmatprep.subr.mxu0 0.0
    %337 = vmatpush2.msra.mxu0 0.0
    %338 = vmatprep.mubr.f32.mxu0 0.0
    %339 = vmatmul.mubr.f32.gmra.mxu0 %v272
    %v340 = vpop.f32.mrf.mxu0
    %v341 = vadd.f32 %v268, %v340
    %v342 = vpop.f32.mrf.mxu0
    %343 = vdwg.mxu0
    %v344 = vmax.f32 %v341, 0.0
    %v345 = vld [vmem:[%s7] sm:$0x1]
    %s346 = sld [smem:[#allocation2]]
    %v347 = vstv %s346
    %v349 = vsel %vm270, %v345, 0
    %v352 = vsel %vm270, %v344, 0
    %354 = vmatprep.subr.mxu0 0.0
    %355 = vmatpush1.xpose.msra.mxu0 0.0
    %356 = vmatprep.subr.mxu0 0.0
    %357 = vmatpush1.xpose.msra.mxu0 0.0
    %358 = vmatprep.subr.mxu0 0.0
    %359 = vmatpush1.xpose.msra.mxu0 0.0
    %360 = vmatprep.subr.mxu0 0.0
    %361 = vmatpush1.xpose.msra.mxu0 0.0
    %362 = vmatprep.subr.mxu0 0.0
    %363 = vmatpush1.xpose.msra.mxu0 0.0
    %364 = vmatprep.subr.mxu0 0.0
    %365 = vmatpush1.xpose.msra.mxu0 0.0
    %366 = vmatprep.subr.mxu0 0.0
    %367 = vmatpush1.xpose.msra.mxu0 0.0
    %368 = vmatprep.subr.mxu0 0.0
    %369 = vmatpush1.xpose.msra.mxu0 0.0
    %370 = vmatprep.subr.mxu0 0.0
    %371 = vmatpush1.xpose.msra.mxu0 0.0
    %372 = vmatprep.subr.mxu0 0.0
    %373 = vmatpush1.xpose.msra.mxu0 0.0
    %374 = vmatprep.subr.mxu0 0.0
    %375 = vmatpush1.xpose.msra.mxu0 0.0
    %376 = vmatprep.subr.mxu0 0.0
    %377 = vmatpush1.xpose.msra.mxu0 0.0
    %378 = vmatprep.subr.mxu0 0.0
    %379 = vmatpush1.xpose.msra.mxu0 0.0
    %380 = vmatprep.subr.mxu0 0.0
    %381 = vmatpush1.xpose.msra.mxu0 0.0
    %382 = vmatprep.subr.mxu0 0.0
    %383 = vmatpush1.xpose.msra.mxu0 0.0
    %384 = vmatprep.subr.mxu0 0.0
    %385 = vmatpush1.xpose.msra.mxu0 %v352
    %386 = vmatprep.subr.mxu0 0.0
    %387 = vmatpush2.xpose.msra.mxu0 0.0
    %388 = vmatprep.subr.mxu0 0.0
    %389 = vmatpush2.xpose.msra.mxu0 0.0
    %390 = vmatprep.subr.mxu0 0.0
    %391 = vmatpush2.xpose.msra.mxu0 0.0
    %392 = vmatprep.subr.mxu0 0.0
    %393 = vmatpush2.xpose.msra.mxu0 0.0
    %394 = vmatprep.subr.mxu0 0.0
    %395 = vmatpush2.xpose.msra.mxu0 0.0
    %396 = vmatprep.subr.mxu0 0.0
    %397 = vmatpush2.xpose.msra.mxu0 0.0
    %398 = vmatprep.subr.mxu0 0.0
    %399 = vmatpush2.xpose.msra.mxu0 0.0
    %400 = vmatprep.subr.mxu0 0.0
    %401 = vmatpush2.xpose.msra.mxu0 0.0
    %402 = vmatprep.subr.mxu0 0.0
    %403 = vmatpush2.xpose.msra.mxu0 0.0
    %404 = vmatprep.subr.mxu0 0.0
    %405 = vmatpush2.xpose.msra.mxu0 0.0
    %406 = vmatprep.subr.mxu0 0.0
    %407 = vmatpush2.xpose.msra.mxu0 0.0
    %408 = vmatprep.subr.mxu0 0.0
    %409 = vmatpush2.xpose.msra.mxu0 0.0
    %410 = vmatprep.subr.mxu0 0.0
    %411 = vmatpush2.xpose.msra.mxu0 0.0
    %412 = vmatprep.subr.mxu0 0.0
    %413 = vmatpush2.xpose.msra.mxu0 0.0
    %414 = vmatprep.subr.mxu0 0.0
    %415 = vmatpush2.xpose.msra.mxu0 0.0
    %416 = vmatprep.subr.mxu0 0.0
    %417 = vmatpush2.xpose.msra.mxu0 0.0
    %418 = vmatprep.mubr.f32.mxu0 0.0
    %419 = vmatmul.mubr.f32.gmra.mxu0 %v349
    %v420 = vpop.f32.mrf.mxu0
    %v421 = vadd.f32 %v347, %v420
    %v422 = vpop.f32.mrf.mxu0
    %423 = vdwg.mxu0
    %vm424 = vcmask 57344
    %425 = vst.msk [vmem:[#allocation12] sm:$0x1] %vm424, %v421
    // Predicated region
    $region58: #{critic_forward.1} parent=1 // pred_check
      _
    $region59: #{critic_forward.1} parent=1 // pred_check_branch
      %427 = sbr.rel (0) target = $region61
    $region60: #{critic_forward.1} parent=1 // pred_region
      %s429 = ssub.s32 16, 16
      %430 = vsyncadd [#allocation5], %s429
      %s432 = sshll.u32 [#allocation12], 4
      %s433 = int_to_ptr.vmem [resolvable:$true] %s432
      %435 = dma.vmem_to_hbm [thread:$0]  %s433, 16, %s9, [#allocation5]
    $region61: #{critic_forward.1} parent=1 // pred_fallthru
      _
    // Predicated region
    $region62: #{critic_forward.1} parent=1 // pred_check
      _
    $region63: #{critic_forward.1} parent=1 // pred_check_branch
      %437 = sbr.rel (0) target = $region65
    $region64: #{critic_forward.1} parent=1 // pred_region
      %438 = dma.done [#allocation5], 16
    $region65: #{critic_forward.1} parent=1 // pred_fallthru
      _
    %439 = vsyncpa [#allocation4], 1
    %440 = vsyncpa [#allocation7], 1
    %441 = vsyncpa [#allocation10], 1
    %442 = vsyncpa [#allocation5], 1

</llo_original>
